<compile_context>
chip_gen: v5e
topology: v5e:2x2
jax: 0.10.0
libtpu: 0.0.40
codegen_flags: <defaults>
</compile_context>

<pallas_src>
import functools

import jax
import jax.numpy as jnp
from jax.experimental import pallas as pl
from jax.experimental.pallas import tpu as pltpu

ALPHA = 0.25
GAMMA = 2.0

NUM_SPLITS = 2                          # leading "parallel" grid axis (v7x: 2 TensorCores)
LANE = 128                              # lane width / tile_n granularity
MAX_TILE_N = 8192                       # cap on samples per grid step
TARGET_TILE_BYTES = 2 * 1024 * 1024     # ~2 MiB of logits per grid step
VMEM_LIMIT_BYTES = 48 * 1024 * 1024     # explicit scoped-VMEM budget (safe on v5e/v6e/v7x)


def _ce_partial_kernel(logits_ref, tgt_ref, out_ref, *, n_total):
    """Accumulates per-sample cross-entropy into a lane-dense partial-sum block.

    logits_ref: (C, TN) block  -- classes on sublanes, samples on lanes
    tgt_ref:    (1, TN) int32  -- target class id per sample
    out_ref:    (1, TN) f32    -- resident accumulator for this grid half
    """
    i = pl.program_id(1)                          # reduction ("arbitrary") axis

    @pl.when(i == 0)
    def _init():
        out_ref[...] = jnp.zeros_like(out_ref)

    x = logits_ref[...].astype(jnp.float32)       # (C, TN) -- f32 math even for bf16 input
    t = tgt_ref[...]                              # (1, TN) int32

    # Numerically-stable per-sample log-sum-exp over the class (sublane) axis.
    m = jnp.max(x, axis=0, keepdims=True)                               # (1, TN)
    lse = m + jnp.log(jnp.sum(jnp.exp(x - m), axis=0, keepdims=True))   # (1, TN)

    # Logit of the target class via iota/compare/select reduce (no dynamic gather).
    cls = jax.lax.broadcasted_iota(jnp.int32, x.shape, 0)               # (C, TN)
    picked = jnp.sum(jnp.where(cls == t, x, 0.0), axis=0, keepdims=True)

    ce = lse - picked                                                   # (1, TN)

    # Mask out zero-padded samples (global sample index >= n_total).
    tn = x.shape[1]
    lane = jax.lax.broadcasted_iota(jnp.int32, (1, tn), 1)
    base = (pl.program_id(0) * pl.num_programs(1) + i) * tn
    valid = (base + lane) < n_total

    out_ref[...] = out_ref[...] + jnp.where(valid, ce, 0.0)


def _pick_tile_n(n, c, itemsize):
    """Samples-per-step tile: multiple of 128, ~TARGET_TILE_BYTES of logits, <= half batch."""
    tn = TARGET_TILE_BYTES // max(1, c * itemsize)
    tn = max(LANE, (tn // LANE) * LANE)
    tn = min(tn, MAX_TILE_N)
    half = -(-n // NUM_SPLITS)                    # ceil(n / NUM_SPLITS)
    half_rounded = -(-half // LANE) * LANE        # round half up to a lane multiple
    return min(tn, half_rounded)


def focal_loss(preds, targets, alpha=ALPHA, gamma=GAMMA, tile_n=None):
    """preds: (N, C) float logits, targets: (N,) int class ids. Returns scalar f32."""
    n, c = preds.shape
    if tile_n is None:
        tile_n = _pick_tile_n(n, c, jnp.dtype(preds.dtype).itemsize)
    assert tile_n % LANE == 0, "tile_n must be a multiple of 128"

    half = -(-n // NUM_SPLITS)                    # ceil
    steps_per_split = -(-half // tile_n)          # ceil
    padded_n = NUM_SPLITS * steps_per_split * tile_n

    logits = preds
    tgt = targets.astype(jnp.int32)
    if padded_n != n:
        logits = jnp.pad(logits, ((0, padded_n - n), (0, 0)))
        tgt = jnp.pad(tgt, (0, padded_n - n))

    # Lane-dense layout: classes on sublanes, samples on lanes.
    # TODO(synk): in production the producer should emit (C, N) directly so this
    # transpose (an extra HBM pass) disappears.
    logits_t = logits.T                           # (C, padded_n)
    tgt2d = tgt.reshape(1, padded_n)              # (1, padded_n)

    kernel = functools.partial(_ce_partial_kernel, n_total=n)

    partials = pl.pallas_call(
        kernel,
        out_shape=jax.ShapeDtypeStruct((1, NUM_SPLITS * tile_n), jnp.float32),
        grid=(NUM_SPLITS, steps_per_split),
        in_specs=[
            # logits column-tile for (half h, step i)
            pl.BlockSpec((c, tile_n), lambda h, i: (0, h * steps_per_split + i)),
            # matching targets tile
            pl.BlockSpec((1, tile_n), lambda h, i: (0, h * steps_per_split + i)),
        ],
        # One lane-dense accumulator block per half; constant across the "arbitrary"
        # (reduction) axis so it stays resident in VMEM.
        out_specs=pl.BlockSpec((1, tile_n), lambda h, i: (0, h)),
        compiler_params=pltpu.CompilerParams(
            dimension_semantics=("parallel", "arbitrary"),
            vmem_limit_bytes=VMEM_LIMIT_BYTES,
        ),
    )(logits_t, tgt2d)

    # Tiny scalar epilogue in the wrapper (mean reduction of CE + focal transform).
    ce = jnp.sum(partials) / jnp.float32(n)
    pt = jnp.exp(-ce)
    return jnp.float32(alpha) * (1.0 - pt) ** jnp.float32(gamma) * ce


def _focal_loss_ref(preds, targets, alpha=ALPHA, gamma=GAMMA):
    """Pure-JAX reference mirroring the PyTorch module."""
    logp = jax.nn.log_softmax(preds.astype(jnp.float32), axis=-1)
    nll = -jnp.take_along_axis(logp, targets[:, None].astype(jnp.int32), axis=-1)[:, 0]
    ce = jnp.mean(nll)
    pt = jnp.exp(-ce)
    return alpha * (1.0 - pt) ** gamma * ce


if __name__ == "__main__":
    key = jax.random.PRNGKey(0)
    k1, k2, k3, k4 = jax.random.split(key, 4)

    # Small demo shape consistent with the module: batch=8 samples, 32 classes.
    N, C = 8, 32
    preds = jax.random.normal(k1, (N, C), dtype=jnp.float32)
    targets = jax.random.randint(k2, (N,), 0, C, dtype=jnp.int32)

    out = jax.block_until_ready(focal_loss(preds, targets))
    ref = _focal_loss_ref(preds, targets)
    assert jnp.allclose(out, ref, rtol=1e-5, atol=1e-5), (out, ref)

    # Ragged batch + bf16 logits + small forced tile -> exercises padding/masking,
    # the multi-step accumulation loop, and the narrow-dtype DMA path.
    N2 = 1000
    preds2 = jax.random.normal(k3, (N2, C), dtype=jnp.float32).astype(jnp.bfloat16)
    targets2 = jax.random.randint(k4, (N2,), 0, C, dtype=jnp.int32)
    out2 = jax.block_until_ready(focal_loss(preds2, targets2, tile_n=128))
    ref2 = _focal_loss_ref(preds2, targets2)
    assert jnp.allclose(out2, ref2, rtol=1e-4, atol=1e-4), (out2, ref2)

    print("KERNEL_OK")
</pallas_src>

<mosaic_0001>
module attributes {stable_mosaic.version = 11 : i64} {
  func.func @_ce_partial_kernel(%arg0: i32, %arg1: i32, %arg2: memref<32x128xf32, #tpu.memory_space<vmem>>, %arg3: memref<1x128xi32, #tpu.memory_space<vmem>>, %arg4: memref<1x128xf32, #tpu.memory_space<vmem>>) attributes {dimension_semantics = [#tpu.dimension_semantics<parallel>, #tpu.dimension_semantics<arbitrary>], iteration_bounds = array<i64: 2, 1>, scalar_prefetch = 0 : i64, scratch_operands = 0 : i64, tpu.core_type = #tpu.core_type<tc>, window_params = [{transform_indices = @transform_0, window_bounds = array<i64: 32, 128>}, {transform_indices = @transform_1, window_bounds = array<i64: 1, 128>}, {transform_indices = @transform_2, window_bounds = array<i64: 1, 128>}]} {
    %c0_i32 = arith.constant 0 : i32
    %0 = arith.cmpi eq, %arg1, %c0_i32 : i32
    %1 = arith.extui %0 : i1 to i32
    %c0_i32_0 = arith.constant 0 : i32
    %2 = arith.cmpi ne, %1, %c0_i32_0 : i32
    scf.if %2 {
      %cst_12 = arith.constant 0.000000e+00 : f32
      %35 = vector.broadcast %cst_12 : f32 to vector<1x128xf32>
      %c0_13 = arith.constant 0 : index
      %c0_14 = arith.constant 0 : index
      %36 = vector.load %arg4[%c0_13, %c0_14] : memref<1x128xf32, #tpu.memory_space<vmem>>, vector<1x128xf32>
      tpu.vector_store %arg4[%c0_13, %c0_14], %35 {strides = array<i32>} : memref<1x128xf32, #tpu.memory_space<vmem>>, vector<1x128xf32>,
    } else {
    }
    %c0 = arith.constant 0 : index
    %c0_1 = arith.constant 0 : index
    %3 = vector.load %arg2[%c0, %c0_1] : memref<32x128xf32, #tpu.memory_space<vmem>>, vector<32x128xf32>
    %c0_2 = arith.constant 0 : index
    %c0_3 = arith.constant 0 : index
    %4 = vector.load %arg3[%c0_2, %c0_3] : memref<1x128xi32, #tpu.memory_space<vmem>>, vector<1x128xi32>
    %cst = arith.constant dense<0xFF800000> : vector<128xf32>
    %5 = vector.multi_reduction <maximumf>, %3, %cst [0] : vector<32x128xf32> to vector<128xf32>
    %6 = vector.shape_cast %5 : vector<128xf32> to vector<1x128xf32>
    %7 = vector.broadcast %6 : vector<1x128xf32> to vector<32x128xf32>
    %8 = arith.subf %3, %7 : vector<32x128xf32>
    %9 = math.exp %8 : vector<32x128xf32>
    %cst_4 = arith.constant dense<0.000000e+00> : vector<128xf32>
    %10 = vector.multi_reduction <add>, %9, %cst_4 [0] : vector<32x128xf32> to vector<128xf32>
    %11 = vector.shape_cast %10 : vector<128xf32> to vector<1x128xf32>
    %12 = math.log %11 : vector<1x128xf32>
    %13 = arith.addf %6, %12 : vector<1x128xf32>
    %14 = tpu.iota {dimensions = array<i32: 0>} : vector<32x128xi32>
    %15 = vector.broadcast %4 : vector<1x128xi32> to vector<32x128xi32>
    %16 = arith.cmpi eq, %14, %15 : vector<32x128xi32>
    %cst_5 = arith.constant 0.000000e+00 : f32
    %17 = vector.broadcast %cst_5 : f32 to vector<32x128xf32>
    %18 = arith.select %16, %3, %17 : vector<32x128xi1>, vector<32x128xf32>
    %cst_6 = arith.constant dense<0.000000e+00> : vector<128xf32>
    %19 = vector.multi_reduction <add>, %18, %cst_6 [0] : vector<32x128xf32> to vector<128xf32>
    %20 = vector.shape_cast %19 : vector<128xf32> to vector<1x128xf32>
    %21 = arith.subf %13, %20 : vector<1x128xf32>
    %22 = tpu.iota {dimensions = array<i32: 1>} : vector<1x128xi32>
    %c1_i32 = arith.constant 1 : i32
    %23 = arith.muli %arg0, %c1_i32 : i32
    %24 = arith.addi %23, %arg1 : i32
    %c128_i32 = arith.constant 128 : i32
    %25 = arith.muli %24, %c128_i32 : i32
    %26 = vector.broadcast %25 : i32 to vector<1x128xi32>
    %27 = arith.addi %26, %22 : vector<1x128xi32>
    %c8_i32 = arith.constant 8 : i32
    %28 = vector.broadcast %c8_i32 : i32 to vector<1x128xi32>
    %29 = arith.cmpi slt, %27, %28 : vector<1x128xi32>
    %c0_7 = arith.constant 0 : index
    %c0_8 = arith.constant 0 : index
    %30 = vector.load %arg4[%c0_7, %c0_8] : memref<1x128xf32, #tpu.memory_space<vmem>>, vector<1x128xf32>
    %cst_9 = arith.constant 0.000000e+00 : f32
    %31 = vector.broadcast %cst_9 : f32 to vector<1x128xf32>
    %32 = arith.select %29, %21, %31 : vector<1x128xi1>, vector<1x128xf32>
    %33 = arith.addf %30, %32 : vector<1x128xf32>
    %c0_10 = arith.constant 0 : index
    %c0_11 = arith.constant 0 : index
    %34 = vector.load %arg4[%c0_10, %c0_11] : memref<1x128xf32, #tpu.memory_space<vmem>>, vector<1x128xf32>
    tpu.vector_store %arg4[%c0_10, %c0_11], %33 {strides = array<i32>} : memref<1x128xf32, #tpu.memory_space<vmem>>, vector<1x128xf32>,
    return
  }
  func.func @transform_0(%arg0: i32, %arg1: i32) -> (i32, i32) {
    %c1_i32 = arith.constant 1 : i32
    %0 = arith.muli %arg0, %c1_i32 : i32
    %1 = arith.addi %0, %arg1 : i32
    %c0_i32 = arith.constant 0 : i32
    %c0_i32_0 = arith.constant 0 : i32
    return %c0_i32, %1 : i32, i32
  }
  func.func @transform_1(%arg0: i32, %arg1: i32) -> (i32, i32) {
    %c1_i32 = arith.constant 1 : i32
    %0 = arith.muli %arg0, %c1_i32 : i32
    %1 = arith.addi %0, %arg1 : i32
    %c0_i32 = arith.constant 0 : i32
    %c0_i32_0 = arith.constant 0 : i32
    return %c0_i32, %1 : i32, i32
  }
  func.func @transform_2(%arg0: i32, %arg1: i32) -> (i32, i32) {
    %c0_i32 = arith.constant 0 : i32
    %c0_i32_0 = arith.constant 0 : i32
    return %c0_i32, %arg0 : i32, i32
  }
}

</mosaic_0001>

<llo_original>
// kernel: tpu_custom_call.1
$region0: #{tpu_custom_call.1}
  #allocation0 [shape = 'u32[]', space=smem, size = 0x4, offset = 0x4, fixed_abs, tag = 'smem constant byte address 0x4 - core index']
  #allocation1 [shape = 'u32[72,128]{1,0:T(1,128)}', space=vmem, size = 0x9000, scoped, tag = 'internal scratch']
  %s0 = inlined_call_operand.hbm [shape: f32[32,256], index: 0, kind: input, shape index: {}]
  %s1 = inlined_call_operand.hbm [shape: s32[1,256], index: 1, kind: input, shape index: {}]
  %s2 = inlined_call_operand.hbm [shape: f32[1,256], index: 2, kind: output, shape index: {}]
  %s3 = sld [smem:[#allocation0]]
  $region53: #{tpu_custom_call.1} parent=0
    _
  %s5 = ssub.s32 1, %s3
  %s6 = scalar_select 0, %s5, %s3
  $region1: #{tpu_custom_call.1} parent=0
    #allocation2 [shape = 'u8[32768]{0}', space=vmem, size = 0x8000, scoped, tag = 'input window, operand 0']
    #allocation3 [shape = 's32[2]{0}', space=sflag, size = 0x8, scoped, tag = 'scoped memory for tpu_custom_call.1']
    #allocation4 [shape = 's32[2]{0}', space=sflag, size = 0x8, scoped, tag = 'scoped memory for tpu_custom_call.1']
    #allocation5 [shape = 'u8[1024]{0}', space=vmem, size = 0x400, scoped, tag = 'input window, operand 1']
    #allocation6 [shape = 's32[2]{0}', space=sflag, size = 0x8, scoped, tag = 'scoped memory for tpu_custom_call.1']
    #allocation7 [shape = 'u8[1024]{0}', space=vmem, size = 0x400, scoped, tag = 'output window, operand 0']
    %7 = vsyncpa [#allocation3], 0
    %s8 = scalar_lea.sflag [#allocation3], 1
    %9 = vsyncpa %s8, 0
    %10 = vsyncpa [#allocation6], 0
    %s11 = scalar_lea.sflag [#allocation6], 1
    %12 = vsyncpa %s11, 0
    %13 = vsyncpa [#allocation4], 0
    %s14 = scalar_lea.sflag [#allocation4], 1
    %15 = vsyncpa %s14, 0
    loop: start=0, step=1, limit=4
    $region2: #{tpu_custom_call.1} parent=1 // loop_pre_header
      _
    $region3: #{tpu_custom_call.1} parent=1 // loop_header
      %s17 = sphi 0, %s21
      %p18 = scmp.ge.s32.totalorder %s17, 4
      %s24 = sphi 0, %s36
      %s25 = sphi 0, %s32
      %s26 = sphi 0, %s24
      %s27 = sphi 0, %s25
      %s28 = sphi 0, %s26
      %s29 = sphi 0, %s27
      %s41 = sphi 0, %s43
      %s44 = sphi 0, %s41
      %s45 = sphi 0, %s44
      %s61 = sphi 0, %s45
      %s69 = sphi 0, %s71
      %s72 = sphi 0, %s69
      %s73 = sphi 0, %s72
      %s89 = sphi 0, %s73
      %s95 = sphi 0, %s97
      %s98 = sphi 0, %s95
      %s99 = sphi 0, %s98
      %s115 = sphi 0, %s99
    $region4: #{tpu_custom_call.1} parent=1 // loop_header_branch
      %20 = sbr.rel (%p18) target = $region8
    $region5: #{tpu_custom_call.1} parent=1 // loop_body
      %s22 = ssub.s32 %s17, 1
      %s23 = ssub.s32 %s17, 2
      %s30 = sadd.s32 1, %s25
      %p31 = scmp.ge.s32.totalorder %s30, 1
      %s32 = scalar_select %p31, 0, %s30
      %s33 = sadd.s32 1, %s24
      %s34 = scalar_select %p31, %s33, %s24
      %p35 = scmp.ge.s32.totalorder %s34, 2
      %s36 = scalar_select %p35, 0, %s34
      %s37 = sadd.s32 %s24, %s25
      %s38 = sadd.s32 %s36, %s32
      %s39 = ssub.s32 %s37, %s38
      %p40 = scmp.eq.s32.totalorder %s39, 0
      %s42 = sadd.s32 %s41, 1
      %s43 = scalar_select %p40, %s41, %s42
      %p46 = pneg %p40
      %p47 = scmp.eq.s32.totalorder %s17, 1
      %p48 = por %p46, %p47
      %p49 = scmp.ne.s32.totalorder %s41, %s44
      %p50 = scmp.eq.s32.totalorder %s17, 0
      %p51 = por %p49, %p50
      %p52 = scmp.ne.s32.totalorder %s41, %s44
      %p53 = scmp.eq.s32.totalorder %s22, 1
      %p54 = por %p52, %p53
      %p55 = scmp.ne.s32.totalorder %s44, %s45
      %p56 = scmp.eq.s32.totalorder %s22, 0
      %p57 = por %p55, %p56
      %p58 = scmp.ne.s32.totalorder %s44, %s45
      %p59 = scmp.eq.s32.totalorder %s23, 1
      %p60 = por %p58, %p59
      %p62 = scmp.ne.s32.totalorder %s45, %s61
      %p63 = scmp.eq.s32.totalorder %s23, 0
      %p64 = por %p62, %p63
      %s65 = sadd.s32 %s24, %s25
      %s66 = sadd.s32 %s36, %s32
      %s67 = ssub.s32 %s65, %s66
      %p68 = scmp.eq.s32.totalorder %s67, 0
      %s70 = sadd.s32 %s69, 1
      %s71 = scalar_select %p68, %s69, %s70
      %p74 = pneg %p68
      %p75 = scmp.eq.s32.totalorder %s17, 1
      %p76 = por %p74, %p75
      %p77 = scmp.ne.s32.totalorder %s69, %s72
      %p78 = scmp.eq.s32.totalorder %s17, 0
      %p79 = por %p77, %p78
      %p80 = scmp.ne.s32.totalorder %s69, %s72
      %p81 = scmp.eq.s32.totalorder %s22, 1
      %p82 = por %p80, %p81
      %p83 = scmp.ne.s32.totalorder %s72, %s73
      %p84 = scmp.eq.s32.totalorder %s22, 0
      %p85 = por %p83, %p84
      %p86 = scmp.ne.s32.totalorder %s72, %s73
      %p87 = scmp.eq.s32.totalorder %s23, 1
      %p88 = por %p86, %p87
      %p90 = scmp.ne.s32.totalorder %s73, %s89
      %p91 = scmp.eq.s32.totalorder %s23, 0
      %p92 = por %p90, %p91
      %s93 = ssub.s32 %s24, %s36
      %p94 = scmp.eq.s32.totalorder %s93, 0
      %s96 = sadd.s32 %s95, 1
      %s97 = scalar_select %p94, %s95, %s96
      %p100 = pneg %p94
      %p101 = scmp.eq.s32.totalorder %s17, 1
      %p102 = por %p100, %p101
      %p103 = scmp.ne.s32.totalorder %s95, %s98
      %p104 = scmp.eq.s32.totalorder %s17, 0
      %p105 = por %p103, %p104
      %p106 = scmp.ne.s32.totalorder %s95, %s98
      %p107 = scmp.eq.s32.totalorder %s22, 1
      %p108 = por %p106, %p107
      %p109 = scmp.ne.s32.totalorder %s98, %s99
      %p110 = scmp.eq.s32.totalorder %s22, 0
      %p111 = por %p109, %p110
      %p112 = scmp.ne.s32.totalorder %s98, %s99
      %p113 = scmp.eq.s32.totalorder %s23, 1
      %p114 = por %p112, %p113
      %p116 = scmp.ne.s32.totalorder %s99, %s115
      %p117 = scmp.eq.s32.totalorder %s23, 0
      %p118 = por %p116, %p117
      %p119 = scmp.le.s32.totalorder 1, %s17
      %p120 = scmp.lt.s32.totalorder %s17, 3
      %p121 = pnand %p119, %p120
      %p122 = pneg %p121
      // Predicated region
      $region9: #{tpu_custom_call.1} parent=5 // pred_check
        _
      $region10: #{tpu_custom_call.1} parent=5 // pred_check_branch
        %124 = sbr.rel (%p121) target = $region12
      $region11: #{tpu_custom_call.1} parent=5 // pred_region
        %s125 = ssub.s32 %s17, 1
      $region12: #{tpu_custom_call.1} parent=5 // pred_fallthru
        _
      %p126 = scmp.lt.s32.totalorder %s17, 2
      // Predicated region
      $region13: #{tpu_custom_call.1} parent=5 // pred_check
        %p127 = pneg %p126
      $region14: #{tpu_custom_call.1} parent=5 // pred_check_branch
        %129 = sbr.rel (%p127) target = $region16
      $region15: #{tpu_custom_call.1} parent=5 // pred_region
        // Predicated region
        $region17: #{tpu_custom_call.1} parent=15 // pred_check
          %p130 = pneg %p51
        $region18: #{tpu_custom_call.1} parent=15 // pred_check_branch
          %132 = sbr.rel (%p130) target = $region20
        $region19: #{tpu_custom_call.1} parent=15 // pred_region
          %s133 = sand.u32 %s41, 1
          %s134 = scalar_lea.sflag [#allocation3], %s133
          %s135 = sand.u32 %s41, 1
          %s136 = smul.addr %s135, 32
          %s137 = scalar_lea.vmem [#allocation2], %s136
          %s138 = sadd.s32 %s24, %s25
          %140 = vsyncadd %s134, 0
          %s141 = smul.addr %s138, 8
          %s142 = scalar_lea.hbm %s0, %s141
          %s143 = sshll.u32 %s142, 4
          %s144 = int_to_ptr.hbm [resolvable:$true] %s143
          %s145 = sshll.u32 %s137, 4
          %s146 = int_to_ptr.vmem [resolvable:$true] %s145
          %151 = dma.hbm_to_vmem [thread:$0]  %s144, 512, %s146, %s134, 256, 128, 8
        $region20: #{tpu_custom_call.1} parent=15 // pred_fallthru
          _
        // Predicated region
        $region21: #{tpu_custom_call.1} parent=15 // pred_check
          %p152 = pneg %p79
        $region22: #{tpu_custom_call.1} parent=15 // pred_check_branch
          %154 = sbr.rel (%p152) target = $region24
        $region23: #{tpu_custom_call.1} parent=15 // pred_region
          %s155 = sand.u32 %s69, 1
          %s156 = scalar_lea.sflag [#allocation6], %s155
          %s157 = sand.u32 %s69, 1
          %s158 = scalar_lea.vmem [#allocation5], %s157
          %s159 = sadd.s32 %s24, %s25
          %161 = vsyncadd %s156, 0
          %s162 = scalar_lea.hbm %s1, %s159
          %s164 = sshll.u32 %s162, 4
          %s165 = int_to_ptr.hbm [resolvable:$true] %s164
          %s166 = sshll.u32 %s158, 4
          %s167 = int_to_ptr.vmem [resolvable:$true] %s166
          %169 = dma.hbm_to_vmem [thread:$0]  %s165, 16, %s167, %s156
        $region24: #{tpu_custom_call.1} parent=15 // pred_fallthru
          _
      $region16: #{tpu_custom_call.1} parent=5 // pred_fallthru
        _
      %p170 = scmp.le.s32.totalorder 1, %s17
      %p171 = scmp.lt.s32.totalorder %s17, 3
      %p172 = pnand %p170, %p171
      %p173 = pneg %p172
      // Predicated region
      $region25: #{tpu_custom_call.1} parent=5 // pred_check
        _
      $region26: #{tpu_custom_call.1} parent=5 // pred_check_branch
        %175 = sbr.rel (%p172) target = $region28
      $region27: #{tpu_custom_call.1} parent=5 // pred_region
        %s176 = ssub.s32 %s17, 1
        %s177 = sand.u32 %s44, 1
        %s178 = scalar_lea.sflag [#allocation3], %s177
        %s179 = sand.u32 %s44, 1
        %s180 = smul.addr %s179, 32
        %s181 = scalar_lea.vmem [#allocation2], %s180
        // Predicated region
        $region29: #{tpu_custom_call.1} parent=27 // pred_check
          %p182 = pneg %p57
        $region30: #{tpu_custom_call.1} parent=27 // pred_check_branch
          %184 = sbr.rel (%p182) target = $region32
        $region31: #{tpu_custom_call.1} parent=27 // pred_region
          %186 = dma.done %s178, 512
        $region32: #{tpu_custom_call.1} parent=27 // pred_fallthru
          _
        %s187 = sand.u32 %s72, 1
        %s188 = scalar_lea.sflag [#allocation6], %s187
        %s189 = sand.u32 %s72, 1
        %s190 = scalar_lea.vmem [#allocation5], %s189
        // Predicated region
        $region33: #{tpu_custom_call.1} parent=27 // pred_check
          %p191 = pneg %p85
        $region34: #{tpu_custom_call.1} parent=27 // pred_check_branch
          %193 = sbr.rel (%p191) target = $region36
        $region35: #{tpu_custom_call.1} parent=27 // pred_region
          %195 = dma.done %s188, 16
        $region36: #{tpu_custom_call.1} parent=27 // pred_fallthru
          _
        %s196 = sand.u32 %s44, 1
        %s197 = scalar_lea.sflag [#allocation3], %s196
        %s198 = sand.u32 %s44, 1
        %s199 = smul.addr %s198, 32
        %s200 = scalar_lea.vmem [#allocation2], %s199
        %p201 = pneg %p57
        %p202 = pneg %p54
        %s203 = sand.u32 %s72, 1
        %s204 = scalar_lea.sflag [#allocation6], %s203
        %s205 = sand.u32 %s72, 1
        %s206 = scalar_lea.vmem [#allocation5], %s205
        %p207 = pneg %p85
        %p208 = pneg %p82
        %p209 = pneg %p111
        %p210 = pneg %p108
        %s211 = sand.u32 %s98, 1
        %s212 = scalar_lea.sflag [#allocation4], %s211
        %s213 = sand.u32 %s98, 1
        %s214 = scalar_lea.vmem [#allocation7], %s213
        %s215 = sadd.s32 %s26, %s27
        %s216 = sadd.s32 %s26, %s27
        %p217 = scmp.eq.s32.totalorder %s27, 0
        // Predicated region
        $region37: #{tpu_custom_call.1} parent=27 // pred_check
          %p218 = pneg %p217
        $region38: #{tpu_custom_call.1} parent=27 // pred_check_branch
          %220 = sbr.rel (%p218) target = $region40
        $region39: #{tpu_custom_call.1} parent=27 // pred_region
          %221 = vst [vmem:[%s214] sm:$0x1] 0.0
        $region40: #{tpu_custom_call.1} parent=27 // pred_fallthru
          _
        %v222 = vld [vmem:[%s181] sm:$0xff]
        %v223 = vld [vmem:[%s181 + $0x8] sm:$0xff]
        %v224 = vld [vmem:[%s181 + $0x10] sm:$0xff]
        %v225 = vld [vmem:[%s181 + $0x18] sm:$0xff]
        %v226 = vld [vmem:[%s190] sm:$0x1]
        %v227 = vmax.f32 %v222, %v223
        %v228 = vmax.f32 %v224, %v225
        %v229 = vmax.f32 %v227, %v228
        %v230 = vrot.slane %v229, 4
        %v231 = vmax.f32 %v229, %v230
        %v232 = vrot.slane %v231, 2
        %v233 = vmax.f32 %v231, %v232
        %v234 = vrot.slane %v233, 1
        %v235 = vmax.f32 %v233, %v234
        %v236 = vsub.f32 %v222, %v235
        %v237 = vsub.f32 %v223, %v235
        %v238 = vsub.f32 %v224, %v235
        %v239 = vsub.f32 %v225, %v235
        %v240 = vmul.f32 %v236, 1.442695
        %v241 = vpow.pop %v240
        %v242 = vmul.f32 %v237, 1.442695
        %v243 = vpow.pop %v242
        %v244 = vmul.f32 %v238, 1.442695
        %v245 = vpow.pop %v244
        %v246 = vmul.f32 %v239, 1.442695
        %v247 = vpow.pop %v246
        %v248 = vadd.f32 %v241, %v243
        %v249 = vadd.f32 %v248, %v245
        %v250 = vadd.f32 %v249, %v247
        %v251 = vrot.slane %v250, 4
        %v252 = vadd.f32 %v250, %v251
        %v253 = vrot.slane %v252, 2
        %v254 = vadd.f32 %v252, %v253
        %v255 = vrot.slane %v254, 1
        %v256 = vadd.f32 %v254, %v255
        %v257 = vlog2.pop %v256
        %v258 = vmul.f32 %v257, 0.6931472
        %v259 = vadd.f32 %v235, %v258
        %v260 = vlaneseq
        %v261 = vshrl.u32 %v260, 7
        %v262 = vadd.s32 %v261, 8
        %v263 = vadd.s32 %v261, 16
        %v264 = vadd.s32 %v261, 24
        %v265 = vperm.slane %v226, 0
        %vm266 = vcmp.eq.s32.totalorder %v261, %v265
        %vm267 = vcmp.eq.s32.totalorder %v262, %v265
        %vm268 = vcmp.eq.s32.totalorder %v263, %v265
        %vm269 = vcmp.eq.s32.totalorder %v264, %v265
        %v270 = vsel %vm266, %v222, 0.0
        %v271 = vsel %vm267, %v223, 0.0
        %v272 = vsel %vm268, %v224, 0.0
        %v273 = vsel %vm269, %v225, 0.0
        %v274 = vadd.f32 %v270, %v271
        %v275 = vadd.f32 %v274, %v272
        %v276 = vadd.f32 %v275, %v273
        %v277 = vrot.slane %v276, 4
        %v278 = vadd.f32 %v276, %v277
        %v279 = vrot.slane %v278, 2
        %v280 = vadd.f32 %v278, %v279
        %v281 = vrot.slane %v280, 1
        %v282 = vadd.f32 %v280, %v281
        %v283 = vsub.f32 %v259, %v282
        %v284 = vlaneseq
        %v285 = vand.u32 %v284, 127
        %s286 = sadd.s32 %s26, %s27
        %s287 = smul.u32 %s286, 128
        %v288 = vstv %s287
        %v289 = vadd.s32 %v288, %v285
        %vm290 = vcmp.lt.s32.totalorder %v289, 8
        %v291 = vld [vmem:[%s214] sm:$0x1]
        %v292 = vsel %vm290, %v283, 0.0
        %v293 = vadd.f32 %v291, %v292
        %294 = vst [vmem:[%s214] sm:$0x1] %v293
        %s295 = sand.u32 %s98, 1
        %s296 = scalar_lea.sflag [#allocation4], %s295
        %s297 = sand.u32 %s98, 1
        %s298 = scalar_lea.vmem [#allocation7], %s297
        // Predicated region
        $region41: #{tpu_custom_call.1} parent=27 // pred_check
          %p299 = pneg %p108
        $region42: #{tpu_custom_call.1} parent=27 // pred_check_branch
          %301 = sbr.rel (%p299) target = $region44
        $region43: #{tpu_custom_call.1} parent=27 // pred_region
          %303 = vsyncadd %s296, 0
          %s304 = scalar_lea.hbm %s2, %s26
          %s306 = sshll.u32 %s298, 4
          %s307 = int_to_ptr.vmem [resolvable:$true] %s306
          %s308 = sshll.u32 %s304, 4
          %s309 = int_to_ptr.hbm [resolvable:$true] %s308
          %311 = dma.vmem_to_hbm [thread:$0]  %s307, 16, %s309, %s296
        $region44: #{tpu_custom_call.1} parent=27 // pred_fallthru
          _
      $region28: #{tpu_custom_call.1} parent=5 // pred_fallthru
        _
      %p312 = scmp.le.s32.totalorder 2, %s17
      // Predicated region
      $region45: #{tpu_custom_call.1} parent=5 // pred_check
        %p313 = pneg %p312
      $region46: #{tpu_custom_call.1} parent=5 // pred_check_branch
        %315 = sbr.rel (%p313) target = $region48
      $region47: #{tpu_custom_call.1} parent=5 // pred_region
        %s316 = ssub.s32 %s17, 2
        // Predicated region
        $region49: #{tpu_custom_call.1} parent=47 // pred_check
          %p317 = pneg %p114
        $region50: #{tpu_custom_call.1} parent=47 // pred_check_branch
          %319 = sbr.rel (%p317) target = $region52
        $region51: #{tpu_custom_call.1} parent=47 // pred_region
          %s320 = sand.u32 %s99, 1
          %s321 = scalar_lea.sflag [#allocation4], %s320
          %s322 = sand.u32 %s99, 1
          %s323 = scalar_lea.vmem [#allocation7], %s322
          %325 = dma.done %s321, 16
        $region52: #{tpu_custom_call.1} parent=47 // pred_fallthru
          _
      $region48: #{tpu_custom_call.1} parent=5 // pred_fallthru
        _
    $region6: #{tpu_custom_call.1} parent=1 // loop_footer
      %s21 = sadd.s32 1, %s17
    $region7: #{tpu_custom_call.1} parent=1 // loop_footer_branch
      %16 = sbr.rel target = $region3
    $region8: #{tpu_custom_call.1} parent=1 // loop_exit
      _
    %326 = vsyncpa [#allocation3], 1
    %s327 = scalar_lea.sflag [#allocation3], 1
    %328 = vsyncpa %s327, 1
    %329 = vsyncpa [#allocation6], 1
    %s330 = scalar_lea.sflag [#allocation6], 1
    %331 = vsyncpa %s330, 1
    %332 = vsyncpa [#allocation4], 1
    %s333 = scalar_lea.sflag [#allocation4], 1
    %334 = vsyncpa %s333, 1

</llo_original>
